<compile_context>
chip_gen: v7x
topology: tpu7x:2x2x1
jax: 0.10.0
libtpu: 0.0.40
codegen_flags: <defaults>
</compile_context>

<pallas_src>
import jax
import jax.numpy as jnp
from jax.experimental import pallas as pl
from jax.experimental.pallas import tpu as pltpu


# ---------------------------------------------------------------------------
# Generation-aware VMEM budgets (v7x: 64 MiB per TensorCore; v5e/v6e: 128 MiB).
# ---------------------------------------------------------------------------
def _vmem_capacity_bytes():
    try:
        return int(pltpu.get_tpu_info().vmem_capacity_bytes)
    except Exception:
        return 64 * 1024 * 1024     # conservative fallback (covers v7x)


def _vmem_limits():
    cap = _vmem_capacity_bytes()
    if cap <= 64 * 1024 * 1024:                  # v7x-class
        lin, rec, tn_pref = 40 << 20, 40 << 20, 512
    else:                                        # v5e / v6e (128 MiB)
        lin, rec, tn_pref = 96 << 20, 64 << 20, 1024
    lin = min(lin, int(cap * 0.75))
    rec = min(rec, int(cap * 0.75))
    return lin, rec, tn_pref


# ---------------------------------------------------------------------------
# Tiled dense projection: out = x @ w + b, tiled over M, N and K (f32 acc).
# ---------------------------------------------------------------------------
def _proj_kernel(x_ref, w_ref, b_ref, o_ref, acc_ref):
    @pl.when(pl.program_id(2) == 0)
    def _():
        acc_ref[...] = jnp.zeros_like(acc_ref)

    acc_ref[...] += jnp.dot(x_ref[...], w_ref[...],
                            preferred_element_type=jnp.float32)

    @pl.when(pl.program_id(2) == pl.num_programs(2) - 1)
    def _():
        o_ref[...] = (acc_ref[...] + b_ref[...]).astype(o_ref.dtype)


def _pick_tile(dim, pref, align):
    """Largest tile <= pref that is a multiple of `align` and divides dim,
    falling back to the full extent (always a legal block)."""
    if dim <= pref:
        return dim
    t = (pref // align) * align
    while t >= align:
        if dim % t == 0:
            return t
        t -= align
    return dim


def pallas_linear(x, w, b, *, out_dtype=jnp.float32,
                  tm_pref=256, tn_pref=512, tk_pref=512,
                  vmem_limit=64 * 1024 * 1024):
    """x: (M, K), w: (K, N), b: (N,) -> (M, N) in out_dtype (f32 accumulation)."""
    M, K = x.shape
    Kw, N = w.shape
    assert K == Kw
    tm = _pick_tile(M, tm_pref, 8)      # sublane-aligned M tile
    tn = _pick_tile(N, tn_pref, 128)    # lane-aligned N tile
    tk = _pick_tile(K, tk_pref, 128)    # K tile bounds weight-column VMEM
    b2 = b.reshape(1, N).astype(jnp.float32)
    return pl.pallas_call(
        _proj_kernel,
        out_shape=jax.ShapeDtypeStruct((M, N), out_dtype),
        grid_spec=pltpu.PrefetchScalarGridSpec(
            num_scalar_prefetch=0,
            grid=(M // tm, N // tn, K // tk),
            in_specs=[
                pl.BlockSpec((tm, tk), lambda i, j, k: (i, k)),     # activations
                pl.BlockSpec((tk, tn), lambda i, j, k: (k, j)),     # weight tile
                pl.BlockSpec((1, tn), lambda i, j, k: (0, j)),      # bias tile
            ],
            out_specs=pl.BlockSpec((tm, tn), lambda i, j, k: (i, j)),
            scratch_shapes=[pltpu.VMEM((tm, tn), jnp.float32)],
        ),
        compiler_params=pltpu.CompilerParams(
            dimension_semantics=("parallel", "parallel", "arbitrary"),
            vmem_limit_bytes=vmem_limit),
    )(x, w, b2)


# ---------------------------------------------------------------------------
# Recurrent kernel: TT timesteps per grid step, h/c carried in VMEM scratch.
# ---------------------------------------------------------------------------
def _lstm_recurrence_kernel(xw_ref, whh_ref, h0_ref, c0_ref, hout_ref, h_s, c_s):
    tc = pl.program_id(1)   # time-chunk index (axis 0 is the batch shard)

    @pl.when(tc == 0)
    def _():
        h_s[...] = h0_ref[...]
        c_s[...] = c0_ref[...]

    H = h_s.shape[1]
    TT = xw_ref.shape[0]
    h = h_s[...]
    c = c_s[...]
    whh = whh_ref[...]                  # bf16, stays resident across the chunk

    # Statically unrolled chunk loop -> static leading-axis indices; the LLO
    # scheduler sees the whole chunk.
    for tt in range(TT):
        # Hoisted input projection; per-step MXU work is only h @ W_hh^T (bf16).
        gates = xw_ref[tt].astype(jnp.float32) + jnp.dot(
            h.astype(jnp.bfloat16), whh, preferred_element_type=jnp.float32)
        # Gate columns pre-permuted to (i, f, o, g): one sigmoid over (B, 3H),
        # one tanh over (B, H); all slices are whole lane tiles when H % 128 == 0.
        sig = jax.nn.sigmoid(gates[:, :3 * H])
        g = jnp.tanh(gates[:, 3 * H:])
        i = sig[:, 0 * H:1 * H]
        f = sig[:, 1 * H:2 * H]
        o = sig[:, 2 * H:3 * H]
        c = f * c + i * g
        h = o * jnp.tanh(c)
        hout_ref[tt, :, :] = h          # length masking applied outside the kernel

    h_s[...] = h
    c_s[...] = c


def _const_spec(shape, index_map, single_buffer):
    """BlockSpec for operands whose block never changes: request 1 buffer."""
    if single_buffer:
        try:
            return pl.BlockSpec(shape, index_map, pipeline_mode=pl.Buffered(1))
        except Exception:
            pass
    return pl.BlockSpec(shape, index_map)


def _pick_time_chunk(T, b_shard, H, vmem_budget_bytes, max_tt=32):
    """Largest TT <= max_tt that divides T and keeps the double-buffered
    (TT, B, 4H) bf16 xW chunk + (TT, B, H) f32 hout chunk within budget."""
    per_tt = 2 * (b_shard * 4 * H * 2) + 2 * (b_shard * H * 4)
    fixed = (2 * (H * 4 * H * 2)          # W_hh bf16 (worst case: 2 buffers)
             + 2 * 2 * (b_shard * H * 4)  # h0 / c0
             + 2 * (b_shard * H * 4))     # h/c scratch
    best = 1
    for tt in range(1, min(T, max_tt) + 1):
        if T % tt == 0 and fixed + tt * per_tt <= vmem_budget_bytes:
            best = tt
    return best


def _run_recurrence(xw, whh_bf, h0, c0, *, TT, n_shards, rec_vmem_limit,
                    single_buffer_consts):
    T, B, H4 = xw.shape
    H = h0.shape[1]
    Bs = B // n_shards
    # h0/c0 blocks are only constant when there is a single batch shard.
    sb_state = single_buffer_consts and (n_shards == 1)
    grid_spec = pltpu.PrefetchScalarGridSpec(
        num_scalar_prefetch=0,
        grid=(n_shards, T // TT),
        in_specs=[
            pl.BlockSpec((TT, Bs, H4), lambda nb, tc: (tc, nb, 0)),      # xW chunk
            _const_spec((H, H4), lambda nb, tc: (0, 0), single_buffer_consts),
            _const_spec((Bs, H), lambda nb, tc: (nb, 0), sb_state),      # h0
            _const_spec((Bs, H), lambda nb, tc: (nb, 0), sb_state),      # c0
        ],
        out_specs=pl.BlockSpec((TT, Bs, H), lambda nb, tc: (tc, nb, 0)),
        scratch_shapes=[pltpu.VMEM((Bs, H), jnp.float32),                # h state
                        pltpu.VMEM((Bs, H), jnp.float32)],               # c state
    )
    return pl.pallas_call(
        _lstm_recurrence_kernel,
        out_shape=jax.ShapeDtypeStruct((T, B, H), jnp.float32),
        grid_spec=grid_spec,
        compiler_params=pltpu.CompilerParams(
            # Batch shards are independent (v7x: split across the 2 TCs);
            # the time axis is a true recurrence.
            dimension_semantics=("parallel", "arbitrary"),
            vmem_limit_bytes=rec_vmem_limit),
    )(xw, whh_bf, h0, c0)


def _permute_gates_ifog(w):
    """Reorder PyTorch gate columns (i, f, g, o) -> (i, f, o, g) along last axis."""
    H = w.shape[-1] // 4
    return jnp.concatenate(
        [w[..., :2 * H], w[..., 3 * H:], w[..., 2 * H:3 * H]], axis=-1)


# ---------------------------------------------------------------------------
# Full forward: embedding -> input proj -> recurrence -> vocab proj.
# ---------------------------------------------------------------------------
def lstm_pallas(sentences, lens, params, *, max_time_chunk=32, batch_shards=None):
    """sentences: (B, T) int32, lens: (B,) int -> logits (B, T, V) f32."""
    B, T = sentences.shape
    H = params["h0"].shape[-1]
    V = params["wp_t"].shape[-1]

    lin_vmem, rec_vmem, tn_pref = _vmem_limits()

    if batch_shards is None:
        # Leading "parallel" axis for the recurrence targets v7x's 2 TensorCores;
        # only used when each shard stays sublane-aligned (>= 8 rows per shard).
        batch_shards = 2 if (B % 16 == 0) else 1
    Bs = B // batch_shards

    # ---- Gate layout + dtypes (one-time, off the serial critical path) ----
    wih = _permute_gates_ifog(params["wih_t"]).astype(jnp.bfloat16)     # (E, 4H)
    whh = _permute_gates_ifog(params["whh_t"]).astype(jnp.bfloat16)     # (H, 4H)
    bias = _permute_gates_ifog(params["b_ih"] + params["b_hh"])         # (4H,)

    # ---- Stage 1: hoisted, time-major input projection (bf16 slab) ---------
    ids_tb = jnp.transpose(sentences)                                    # (T, B) int32
    # TODO(synk): the per-token embedding row gather stays in XLA; a
    # data-dependent gather has no clean rectangular BlockSpec form.
    emb_bf = params["emb"].astype(jnp.bfloat16)
    x_tm = emb_bf[ids_tb].reshape(T * B, -1)                             # (T*B, E) bf16
    xw = pallas_linear(x_tm, wih, bias, out_dtype=jnp.bfloat16,
                       tn_pref=tn_pref, vmem_limit=lin_vmem)
    xw = xw.reshape(T, B, 4 * H)                                         # bf16

    h0 = params["h0"].reshape(B, H).astype(jnp.float32)
    c0 = params["c0"].reshape(B, H).astype(jnp.float32)

    # ---- Stage 2: serial recurrence, TT timesteps per grid step ------------
    TT = _pick_time_chunk(T, Bs, H, int(rec_vmem * 0.6), max_tt=max_time_chunk)
    try:
        h_seq = _run_recurrence(xw, whh, h0, c0, TT=TT, n_shards=batch_shards,
                                rec_vmem_limit=rec_vmem, single_buffer_consts=True)
    except Exception:
        # Fallback if this JAX build rejects single-buffer pipeline_mode.
        h_seq = _run_recurrence(xw, whh, h0, c0, TT=TT, n_shards=batch_shards,
                                rec_vmem_limit=rec_vmem, single_buffer_consts=False)

    # ---- pad_packed_sequence mask, fused into the pre-Stage-3 transpose ----
    t_idx = jnp.arange(T, dtype=jnp.int32)[:, None]
    mask = (t_idx < lens.astype(jnp.int32)[None, :]).astype(jnp.float32)  # (T, B)
    h_bt = jnp.transpose(h_seq * mask[:, :, None], (1, 0, 2)).reshape(B * T, H)

    # ---- Stage 3: vocab projection, batch-first lane-dense output ----------
    logits = pallas_linear(h_bt, params["wp_t"], params["bp"],
                           out_dtype=jnp.float32, tn_pref=tn_pref,
                           vmem_limit=lin_vmem)
    return logits.reshape(B, T, V)


def model_forward(sentences, sentence_len, lens, params):
    """Equivalent of LSTM.forward(sentences, sentence_len, lens)."""
    del sentence_len  # sentences already padded to total_length
    return lstm_pallas(sentences, lens, params)


def init_params(key, vocab, E, H, B, pad_index):
    ks = jax.random.split(key, 9)
    bound = float(1.0 / (H ** 0.5))
    emb = jax.random.normal(ks[0], (vocab, E), jnp.float32)
    emb = emb.at[pad_index].set(0.0)        # padding_idx row is zero
    return {
        "emb": emb,
        "wih_t": jax.random.uniform(ks[1], (E, 4 * H), jnp.float32, -bound, bound),
        "whh_t": jax.random.uniform(ks[2], (H, 4 * H), jnp.float32, -bound, bound),
        "b_ih": jax.random.uniform(ks[3], (4 * H,), jnp.float32, -bound, bound),
        "b_hh": jax.random.uniform(ks[4], (4 * H,), jnp.float32, -bound, bound),
        "wp_t": jax.random.uniform(ks[5], (H, vocab), jnp.float32, -bound, bound),
        "bp": jax.random.uniform(ks[6], (vocab,), jnp.float32, -bound, bound),
        "h0": jax.random.normal(ks[7], (1, B, H), jnp.float32),
        "c0": jax.random.normal(ks[8], (1, B, H), jnp.float32),
    }


def reference_forward(sentences, lens, params):
    """Pure-JAX f32 reference mirroring the PyTorch semantics (original gate order)."""
    embeds = params["emb"][sentences]                                   # (B, T, E)
    B, T, E = embeds.shape
    H = params["h0"].shape[-1]
    h = params["h0"].reshape(B, H)
    c = params["c0"].reshape(B, H)
    b = params["b_ih"] + params["b_hh"]
    outs = []
    for t in range(T):
        x = embeds[:, t, :]
        gates = x @ params["wih_t"] + h @ params["whh_t"] + b
        i = jax.nn.sigmoid(gates[:, 0 * H:1 * H])
        f = jax.nn.sigmoid(gates[:, 1 * H:2 * H])
        g = jnp.tanh(gates[:, 2 * H:3 * H])
        o = jax.nn.sigmoid(gates[:, 3 * H:4 * H])
        c = f * c + i * g
        h = o * jnp.tanh(c)
        mask = (lens > t).astype(jnp.float32)[:, None]
        outs.append(h * mask)
    h_seq = jnp.stack(outs, axis=1)                                     # (B, T, H)
    return h_seq @ params["wp_t"] + params["bp"]


if __name__ == "__main__":
    # Small but lane/sublane-aligned config (B % 8 == 0, H % 128 == 0,
    # 4H and V multiples of 128).
    VOCAB, EMB, HID = 256, 32, 128
    BATCH, SEQ, PAD = 8, 16, 0

    key = jax.random.PRNGKey(0)
    k_param, k_sent, k_len = jax.random.split(key, 3)
    params = init_params(k_param, VOCAB, EMB, HID, BATCH, PAD)

    sentences = jax.random.randint(k_sent, (BATCH, SEQ), 1, VOCAB, jnp.int32)
    lens = jax.random.randint(k_len, (BATCH,), 3, SEQ + 1, jnp.int32)
    lens = lens.at[0].set(SEQ)                       # at least one full-length row
    pos = jnp.arange(SEQ)[None, :]
    sentences = jnp.where(pos < lens[:, None], sentences, PAD)

    out = model_forward(sentences, SEQ, lens, params)
    out = jax.block_until_ready(out)

    ref = reference_forward(sentences, lens, params)
    assert out.shape == (BATCH, SEQ, VOCAB)
    # bf16 MXU path (per performance review) vs f32 reference: slightly looser
    # tolerance than pure-f32, accumulation stays f32 everywhere.
    assert jnp.allclose(out, ref, atol=2e-2, rtol=2e-2), "mismatch vs reference"

    print("KERNEL_OK")
</pallas_src>

<mosaic_0001>
module attributes {stable_mosaic.version = 11 : i64} {
  func.func @_proj_kernel(%arg0: i32, %arg1: i32, %arg2: i32, %arg3: memref<128x32xbf16, #tpu.memory_space<vmem>>, %arg4: memref<32x512xbf16, #tpu.memory_space<vmem>>, %arg5: memref<1x512xf32, #tpu.memory_space<vmem>>, %arg6: memref<128x512xbf16, #tpu.memory_space<vmem>>, %arg7: memref<128x512xf32, #tpu.memory_space<vmem>>) attributes {dimension_semantics = [#tpu.dimension_semantics<parallel>, #tpu.dimension_semantics<parallel>, #tpu.dimension_semantics<arbitrary>], iteration_bounds = array<i64: 1, 1, 1>, scalar_prefetch = 0 : i64, scratch_operands = 1 : i64, tpu.core_type = #tpu.core_type<tc>, window_params = [{transform_indices = @transform_0, window_bounds = array<i64: 128, 32>}, {transform_indices = @transform_1, window_bounds = array<i64: 32, 512>}, {transform_indices = @transform_2, window_bounds = array<i64: 1, 512>}, {transform_indices = @transform_3, window_bounds = array<i64: 128, 512>}]} {
    %c0_i32 = arith.constant 0 : i32
    %0 = arith.cmpi eq, %arg2, %c0_i32 : i32
    %1 = arith.extui %0 : i1 to i32
    %c0_i32_0 = arith.constant 0 : i32
    %2 = arith.cmpi ne, %1, %c0_i32_0 : i32
    scf.if %2 {
      %cst_10 = arith.constant 0.000000e+00 : f32
      %12 = vector.broadcast %cst_10 : f32 to vector<128x512xf32>
      %c0_11 = arith.constant 0 : index
      %c0_12 = arith.constant 0 : index
      %13 = vector.load %arg7[%c0_11, %c0_12] : memref<128x512xf32, #tpu.memory_space<vmem>>, vector<128x512xf32>
      tpu.vector_store %arg7[%c0_11, %c0_12], %12 {strides = array<i32>} : memref<128x512xf32, #tpu.memory_space<vmem>>, vector<128x512xf32>,
    } else {
    }
    %c0 = arith.constant 0 : index
    %c0_1 = arith.constant 0 : index
    %3 = vector.load %arg7[%c0, %c0_1] : memref<128x512xf32, #tpu.memory_space<vmem>>, vector<128x512xf32>
    %c0_2 = arith.constant 0 : index
    %c0_3 = arith.constant 0 : index
    %4 = vector.load %arg3[%c0_2, %c0_3] : memref<128x32xbf16, #tpu.memory_space<vmem>>, vector<128x32xbf16>
    %c0_4 = arith.constant 0 : index
    %c0_5 = arith.constant 0 : index
    %5 = vector.load %arg4[%c0_4, %c0_5] : memref<32x512xbf16, #tpu.memory_space<vmem>>, vector<32x512xbf16>
    %cst = arith.constant dense<0.000000e+00> : vector<128x512xf32>
    %6 = tpu.matmul %4, %5, %cst {dimension_numbers = #tpu.dot_dimension_numbers<[1], [0], [0], [1], [0, 0, 1, 1], [], []>} : vector<128x32xbf16>, vector<32x512xbf16>, vector<128x512xf32> -> vector<128x512xf32>
    %7 = arith.addf %3, %6 : vector<128x512xf32>
    %c0_6 = arith.constant 0 : index
    %c0_7 = arith.constant 0 : index
    %8 = vector.load %arg7[%c0_6, %c0_7] : memref<128x512xf32, #tpu.memory_space<vmem>>, vector<128x512xf32>
    tpu.vector_store %arg7[%c0_6, %c0_7], %7 {strides = array<i32>} : memref<128x512xf32, #tpu.memory_space<vmem>>, vector<128x512xf32>,
    %c0_i32_8 = arith.constant 0 : i32
    %9 = arith.cmpi eq, %arg2, %c0_i32_8 : i32
    %10 = arith.extui %9 : i1 to i32
    %c0_i32_9 = arith.constant 0 : i32
    %11 = arith.cmpi ne, %10, %c0_i32_9 : i32
    scf.if %11 {
      %c0_10 = arith.constant 0 : index
      %c0_11 = arith.constant 0 : index
      %12 = vector.load %arg7[%c0_10, %c0_11] : memref<128x512xf32, #tpu.memory_space<vmem>>, vector<128x512xf32>
      %c0_12 = arith.constant 0 : index
      %c0_13 = arith.constant 0 : index
      %13 = vector.load %arg5[%c0_12, %c0_13] : memref<1x512xf32, #tpu.memory_space<vmem>>, vector<1x512xf32>
      %14 = vector.broadcast %13 : vector<1x512xf32> to vector<128x512xf32>
      %15 = arith.addf %12, %14 : vector<128x512xf32>
      %16 = arith.truncf %15 : vector<128x512xf32> to vector<128x512xbf16>
      %c0_14 = arith.constant 0 : index
      %c0_15 = arith.constant 0 : index
      %17 = vector.load %arg6[%c0_14, %c0_15] : memref<128x512xbf16, #tpu.memory_space<vmem>>, vector<128x512xbf16>
      tpu.vector_store %arg6[%c0_14, %c0_15], %16 {strides = array<i32>} : memref<128x512xbf16, #tpu.memory_space<vmem>>, vector<128x512xbf16>,
    } else {
    }
    return
  }
  func.func @transform_0(%arg0: i32, %arg1: i32, %arg2: i32) -> (i32, i32) {
    %c0_i32 = arith.constant 0 : i32
    return %arg0, %arg2 : i32, i32
  }
  func.func @transform_1(%arg0: i32, %arg1: i32, %arg2: i32) -> (i32, i32) {
    %c0_i32 = arith.constant 0 : i32
    return %arg2, %arg1 : i32, i32
  }
  func.func @transform_2(%arg0: i32, %arg1: i32, %arg2: i32) -> (i32, i32) {
    %c0_i32 = arith.constant 0 : i32
    %c0_i32_0 = arith.constant 0 : i32
    return %c0_i32, %arg1 : i32, i32
  }
  func.func @transform_3(%arg0: i32, %arg1: i32, %arg2: i32) -> (i32, i32) {
    %c0_i32 = arith.constant 0 : i32
    return %arg0, %arg1 : i32, i32
  }
}

</mosaic_0001>

<llo_original>
// kernel: tpu_custom_call.1
$region0: #{tpu_custom_call.1}
  #allocation0 [shape = 'u32[]', space=smem, size = 0x4, offset = 0x4, fixed_abs, tag = 'smem constant byte address 0x4 - core index']
  #allocation1 [shape = 'u32[144,128]{1,0:T(1,128)}', space=vmem, size = 0x12000, scoped, tag = 'internal scratch']
  #allocation2 [shape = 'f32[128,512]{1,0:T(8,128)}', space=vmem, size = 0x40000, scoped, tag = 'scratch operand']
  %s0 = inlined_call_operand.vmem [shape: bf16[128,32], index: 0, kind: input, shape index: {}]
  %s1 = inlined_call_operand.vmem [shape: bf16[32,512], index: 1, kind: input, shape index: {}]
  %s2 = inlined_call_operand.vmem [shape: f32[1,512], index: 2, kind: input, shape index: {}]
  %s3 = inlined_call_operand.hbm [shape: bf16[128,512], index: 3, kind: output, shape index: {}]
  %s4 = sld [smem:[#allocation0]]
  $region30: #{tpu_custom_call.1} parent=0
    _
  %s6 = ssub.s32 1, %s4
  %s7 = scalar_select 0, %s6, %s4
  $region1: #{tpu_custom_call.1} parent=0
    #allocation3 [shape = 'u8[131072]{0}', space=vmem, size = 0x20000, scoped, tag = 'output window, operand 0, single buffered']
    #allocation4 [shape = 's32[1]{0}', space=sflag, size = 0x4, scoped, tag = 'scoped memory for tpu_custom_call.1']
    %8 = vsyncpa [#allocation4], 0
    // Predicated region
    $region2: #{tpu_custom_call.1} parent=1 // pred_check
      _
    $region3: #{tpu_custom_call.1} parent=1 // pred_check_branch
      %10 = sbr.rel (0) target = $region5
    $region4: #{tpu_custom_call.1} parent=1 // pred_region
      _
    $region5: #{tpu_custom_call.1} parent=1 // pred_fallthru
      _
    // Predicated region
    $region6: #{tpu_custom_call.1} parent=1 // pred_check
      _
    $region7: #{tpu_custom_call.1} parent=1 // pred_check_branch
      %12 = sbr.rel (0) target = $region9
    $region8: #{tpu_custom_call.1} parent=1 // pred_region
      _
    $region9: #{tpu_custom_call.1} parent=1 // pred_fallthru
      _
    // Predicated region
    $region10: #{tpu_custom_call.1} parent=1 // pred_check
      _
    $region11: #{tpu_custom_call.1} parent=1 // pred_check_branch
      %14 = sbr.rel (0) target = $region13
    $region12: #{tpu_custom_call.1} parent=1 // pred_region
      _
    $region13: #{tpu_custom_call.1} parent=1 // pred_fallthru
      _
    %p16 = scmp.eq.s32.totalorder 0, 0
    // Predicated region
    $region14: #{tpu_custom_call.1} parent=1 // pred_check
      %p17 = pneg %p16
    $region15: #{tpu_custom_call.1} parent=1 // pred_check_branch
      %19 = sbr.rel (%p17) target = $region17
    $region16: #{tpu_custom_call.1} parent=1 // pred_region
      %20 = vst [vmem:[#allocation2] sm:$0xff] 0.0
      %21 = vst [vmem:[#allocation2 + $0x8] sm:$0xff] 0.0
      %22 = vst [vmem:[#allocation2 + $0x10] sm:$0xff] 0.0
      %23 = vst [vmem:[#allocation2 + $0x18] sm:$0xff] 0.0
      %24 = vst [vmem:[#allocation2 + $0x20] sm:$0xff] 0.0
      %25 = vst [vmem:[#allocation2 + $0x28] sm:$0xff] 0.0
      %26 = vst [vmem:[#allocation2 + $0x30] sm:$0xff] 0.0
      %27 = vst [vmem:[#allocation2 + $0x38] sm:$0xff] 0.0
      %28 = vst [vmem:[#allocation2 + $0x40] sm:$0xff] 0.0
      %29 = vst [vmem:[#allocation2 + $0x48] sm:$0xff] 0.0
      %30 = vst [vmem:[#allocation2 + $0x50] sm:$0xff] 0.0
      %31 = vst [vmem:[#allocation2 + $0x58] sm:$0xff] 0.0
      %32 = vst [vmem:[#allocation2 + $0x60] sm:$0xff] 0.0
      %33 = vst [vmem:[#allocation2 + $0x68] sm:$0xff] 0.0
      %34 = vst [vmem:[#allocation2 + $0x70] sm:$0xff] 0.0
      %35 = vst [vmem:[#allocation2 + $0x78] sm:$0xff] 0.0
      %36 = vst [vmem:[#allocation2 + $0x80] sm:$0xff] 0.0
      %37 = vst [vmem:[#allocation2 + $0x88] sm:$0xff] 0.0
      %38 = vst [vmem:[#allocation2 + $0x90] sm:$0xff] 0.0
      %39 = vst [vmem:[#allocation2 + $0x98] sm:$0xff] 0.0
      %40 = vst [vmem:[#allocation2 + $0xa0] sm:$0xff] 0.0
      %41 = vst [vmem:[#allocation2 + $0xa8] sm:$0xff] 0.0
      %42 = vst [vmem:[#allocation2 + $0xb0] sm:$0xff] 0.0
      %43 = vst [vmem:[#allocation2 + $0xb8] sm:$0xff] 0.0
      %44 = vst [vmem:[#allocation2 + $0xc0] sm:$0xff] 0.0
      %45 = vst [vmem:[#allocation2 + $0xc8] sm:$0xff] 0.0
      %46 = vst [vmem:[#allocation2 + $0xd0] sm:$0xff] 0.0
      %47 = vst [vmem:[#allocation2 + $0xd8] sm:$0xff] 0.0
      %48 = vst [vmem:[#allocation2 + $0xe0] sm:$0xff] 0.0
      %49 = vst [vmem:[#allocation2 + $0xe8] sm:$0xff] 0.0
      %50 = vst [vmem:[#allocation2 + $0xf0] sm:$0xff] 0.0
      %51 = vst [vmem:[#allocation2 + $0xf8] sm:$0xff] 0.0
      %52 = vst [vmem:[#allocation2 + $0x100] sm:$0xff] 0.0
      %53 = vst [vmem:[#allocation2 + $0x108] sm:$0xff] 0.0
      %54 = vst [vmem:[#allocation2 + $0x110] sm:$0xff] 0.0
      %55 = vst [vmem:[#allocation2 + $0x118] sm:$0xff] 0.0
      %56 = vst [vmem:[#allocation2 + $0x120] sm:$0xff] 0.0
      %57 = vst [vmem:[#allocation2 + $0x128] sm:$0xff] 0.0
      %58 = vst [vmem:[#allocation2 + $0x130] sm:$0xff] 0.0
      %59 = vst [vmem:[#allocation2 + $0x138] sm:$0xff] 0.0
      %60 = vst [vmem:[#allocation2 + $0x140] sm:$0xff] 0.0
      %61 = vst [vmem:[#allocation2 + $0x148] sm:$0xff] 0.0
      %62 = vst [vmem:[#allocation2 + $0x150] sm:$0xff] 0.0
      %63 = vst [vmem:[#allocation2 + $0x158] sm:$0xff] 0.0
      %64 = vst [vmem:[#allocation2 + $0x160] sm:$0xff] 0.0
      %65 = vst [vmem:[#allocation2 + $0x168] sm:$0xff] 0.0
      %66 = vst [vmem:[#allocation2 + $0x170] sm:$0xff] 0.0
      %67 = vst [vmem:[#allocation2 + $0x178] sm:$0xff] 0.0
      %68 = vst [vmem:[#allocation2 + $0x180] sm:$0xff] 0.0
      %69 = vst [vmem:[#allocation2 + $0x188] sm:$0xff] 0.0
      %70 = vst [vmem:[#allocation2 + $0x190] sm:$0xff] 0.0
      %71 = vst [vmem:[#allocation2 + $0x198] sm:$0xff] 0.0
      %72 = vst [vmem:[#allocation2 + $0x1a0] sm:$0xff] 0.0
      %73 = vst [vmem:[#allocation2 + $0x1a8] sm:$0xff] 0.0
      %74 = vst [vmem:[#allocation2 + $0x1b0] sm:$0xff] 0.0
      %75 = vst [vmem:[#allocation2 + $0x1b8] sm:$0xff] 0.0
      %76 = vst [vmem:[#allocation2 + $0x1c0] sm:$0xff] 0.0
      %77 = vst [vmem:[#allocation2 + $0x1c8] sm:$0xff] 0.0
      %78 = vst [vmem:[#allocation2 + $0x1d0] sm:$0xff] 0.0
      %79 = vst [vmem:[#allocation2 + $0x1d8] sm:$0xff] 0.0
      %80 = vst [vmem:[#allocation2 + $0x1e0] sm:$0xff] 0.0
      %81 = vst [vmem:[#allocation2 + $0x1e8] sm:$0xff] 0.0
      %82 = vst [vmem:[#allocation2 + $0x1f0] sm:$0xff] 0.0
      %83 = vst [vmem:[#allocation2 + $0x1f8] sm:$0xff] 0.0
    $region17: #{tpu_custom_call.1} parent=1 // pred_fallthru
      _
    %v84 = vld [vmem:[#allocation2] sm:$0xff]
    %v85 = vld [vmem:[#allocation2 + $0x8] sm:$0xff]
    %v86 = vld [vmem:[#allocation2 + $0x10] sm:$0xff]
    %v87 = vld [vmem:[#allocation2 + $0x18] sm:$0xff]
    %v88 = vld [vmem:[#allocation2 + $0x20] sm:$0xff]
    %v89 = vld [vmem:[#allocation2 + $0x28] sm:$0xff]
    %v90 = vld [vmem:[#allocation2 + $0x30] sm:$0xff]
    %v91 = vld [vmem:[#allocation2 + $0x38] sm:$0xff]
    %v92 = vld [vmem:[#allocation2 + $0x40] sm:$0xff]
    %v93 = vld [vmem:[#allocation2 + $0x48] sm:$0xff]
    %v94 = vld [vmem:[#allocation2 + $0x50] sm:$0xff]
    %v95 = vld [vmem:[#allocation2 + $0x58] sm:$0xff]
    %v96 = vld [vmem:[#allocation2 + $0x60] sm:$0xff]
    %v97 = vld [vmem:[#allocation2 + $0x68] sm:$0xff]
    %v98 = vld [vmem:[#allocation2 + $0x70] sm:$0xff]
    %v99 = vld [vmem:[#allocation2 + $0x78] sm:$0xff]
    %v100 = vld [vmem:[#allocation2 + $0x80] sm:$0xff]
    %v101 = vld [vmem:[#allocation2 + $0x88] sm:$0xff]
    %v102 = vld [vmem:[#allocation2 + $0x90] sm:$0xff]
    %v103 = vld [vmem:[#allocation2 + $0x98] sm:$0xff]
    %v104 = vld [vmem:[#allocation2 + $0xa0] sm:$0xff]
    %v105 = vld [vmem:[#allocation2 + $0xa8] sm:$0xff]
    %v106 = vld [vmem:[#allocation2 + $0xb0] sm:$0xff]
    %v107 = vld [vmem:[#allocation2 + $0xb8] sm:$0xff]
    %v108 = vld [vmem:[#allocation2 + $0xc0] sm:$0xff]
    %v109 = vld [vmem:[#allocation2 + $0xc8] sm:$0xff]
    %v110 = vld [vmem:[#allocation2 + $0xd0] sm:$0xff]
    %v111 = vld [vmem:[#allocation2 + $0xd8] sm:$0xff]
    %v112 = vld [vmem:[#allocation2 + $0xe0] sm:$0xff]
    %v113 = vld [vmem:[#allocation2 + $0xe8] sm:$0xff]
    %v114 = vld [vmem:[#allocation2 + $0xf0] sm:$0xff]
    %v115 = vld [vmem:[#allocation2 + $0xf8] sm:$0xff]
    %v116 = vld [vmem:[#allocation2 + $0x100] sm:$0xff]
    %v117 = vld [vmem:[#allocation2 + $0x108] sm:$0xff]
    %v118 = vld [vmem:[#allocation2 + $0x110] sm:$0xff]
    %v119 = vld [vmem:[#allocation2 + $0x118] sm:$0xff]
    %v120 = vld [vmem:[#allocation2 + $0x120] sm:$0xff]
    %v121 = vld [vmem:[#allocation2 + $0x128] sm:$0xff]
    %v122 = vld [vmem:[#allocation2 + $0x130] sm:$0xff]
    %v123 = vld [vmem:[#allocation2 + $0x138] sm:$0xff]
    %v124 = vld [vmem:[#allocation2 + $0x140] sm:$0xff]
    %v125 = vld [vmem:[#allocation2 + $0x148] sm:$0xff]
    %v126 = vld [vmem:[#allocation2 + $0x150] sm:$0xff]
    %v127 = vld [vmem:[#allocation2 + $0x158] sm:$0xff]
    %v128 = vld [vmem:[#allocation2 + $0x160] sm:$0xff]
    %v129 = vld [vmem:[#allocation2 + $0x168] sm:$0xff]
    %v130 = vld [vmem:[#allocation2 + $0x170] sm:$0xff]
    %v131 = vld [vmem:[#allocation2 + $0x178] sm:$0xff]
    %v132 = vld [vmem:[#allocation2 + $0x180] sm:$0xff]
    %v133 = vld [vmem:[#allocation2 + $0x188] sm:$0xff]
    %v134 = vld [vmem:[#allocation2 + $0x190] sm:$0xff]
    %v135 = vld [vmem:[#allocation2 + $0x198] sm:$0xff]
    %v136 = vld [vmem:[#allocation2 + $0x1a0] sm:$0xff]
    %v137 = vld [vmem:[#allocation2 + $0x1a8] sm:$0xff]
    %v138 = vld [vmem:[#allocation2 + $0x1b0] sm:$0xff]
    %v139 = vld [vmem:[#allocation2 + $0x1b8] sm:$0xff]
    %v140 = vld [vmem:[#allocation2 + $0x1c0] sm:$0xff]
    %v141 = vld [vmem:[#allocation2 + $0x1c8] sm:$0xff]
    %v142 = vld [vmem:[#allocation2 + $0x1d0] sm:$0xff]
    %v143 = vld [vmem:[#allocation2 + $0x1d8] sm:$0xff]
    %v144 = vld [vmem:[#allocation2 + $0x1e0] sm:$0xff]
    %v145 = vld [vmem:[#allocation2 + $0x1e8] sm:$0xff]
    %v146 = vld [vmem:[#allocation2 + $0x1f0] sm:$0xff]
    %v147 = vld [vmem:[#allocation2 + $0x1f8] sm:$0xff]
    %v148 = vld [vmem:[%s0] sm:$0xf]
    %v149 = vld [vmem:[%s0 + $0x4] sm:$0xf]
    %v150 = vld [vmem:[%s0 + $0x8] sm:$0xf]
    %v151 = vld [vmem:[%s0 + $0xc] sm:$0xf]
    %v152 = vld [vmem:[%s0 + $0x10] sm:$0xf]
    %v153 = vld [vmem:[%s0 + $0x14] sm:$0xf]
    %v154 = vld [vmem:[%s0 + $0x18] sm:$0xf]
    %v155 = vld [vmem:[%s0 + $0x1c] sm:$0xf]
    %v156 = vld [vmem:[%s0 + $0x20] sm:$0xf]
    %v157 = vld [vmem:[%s0 + $0x24] sm:$0xf]
    %v158 = vld [vmem:[%s0 + $0x28] sm:$0xf]
    %v159 = vld [vmem:[%s0 + $0x2c] sm:$0xf]
    %v160 = vld [vmem:[%s0 + $0x30] sm:$0xf]
    %v161 = vld [vmem:[%s0 + $0x34] sm:$0xf]
    %v162 = vld [vmem:[%s0 + $0x38] sm:$0xf]
    %v163 = vld [vmem:[%s0 + $0x3c] sm:$0xf]
    %v164 = vld [vmem:[%s1] sm:$0xff]
    %v165 = vld [vmem:[%s1 + $0x8] sm:$0xff]
    %v166 = vld [vmem:[%s1 + $0x10] sm:$0xff]
    %v167 = vld [vmem:[%s1 + $0x18] sm:$0xff]
    %v168 = vld [vmem:[%s1 + $0x20] sm:$0xff]
    %v169 = vld [vmem:[%s1 + $0x28] sm:$0xff]
    %v170 = vld [vmem:[%s1 + $0x30] sm:$0xff]
    %v171 = vld [vmem:[%s1 + $0x38] sm:$0xff]
    %v188 = vunpack.c.l.b16 %v148
    %v189 = vunpack.c.l.b16 %v149
    %v190 = vunpack.c.l.b16 %v150
    %v191 = vunpack.c.l.b16 %v151
    %v192 = vunpack.c.l.b16 %v152
    %v193 = vunpack.c.l.b16 %v153
    %v194 = vunpack.c.l.b16 %v154
    %v195 = vunpack.c.l.b16 %v155
    %v196 = vunpack.c.l.b16 %v156
    %v197 = vunpack.c.l.b16 %v157
    %v198 = vunpack.c.l.b16 %v158
    %v199 = vunpack.c.l.b16 %v159
    %v200 = vunpack.c.l.b16 %v160
    %v201 = vunpack.c.l.b16 %v161
    %v202 = vunpack.c.l.b16 %v162
    %v203 = vunpack.c.l.b16 %v163
    %v204 = vpack.c.b16 %v189, %v188
    %v205 = vpack.c.b16 %v191, %v190
    %v206 = vpack.c.b16 %v193, %v192
    %v207 = vpack.c.b16 %v195, %v194
    %v208 = vpack.c.b16 %v197, %v196
    %v209 = vpack.c.b16 %v199, %v198
    %v210 = vpack.c.b16 %v201, %v200
    %v211 = vpack.c.b16 %v203, %v202
    %v220 = vunpack.c.l.b16 %v164
    %v221 = vunpack.c.h.b16 %v164
    %v222 = vunpack.c.l.b16 %v165
    %v223 = vunpack.c.h.b16 %v165
    %v224 = vunpack.c.l.b16 %v166
    %v225 = vunpack.c.h.b16 %v166
    %v226 = vunpack.c.l.b16 %v167
    %v227 = vunpack.c.h.b16 %v167
    %v228 = vunpack.c.l.b16 %v168
    %v229 = vunpack.c.h.b16 %v168
    %v230 = vunpack.c.l.b16 %v169
    %v231 = vunpack.c.h.b16 %v169
    %v232 = vunpack.c.l.b16 %v170
    %v233 = vunpack.c.h.b16 %v170
    %v234 = vunpack.c.l.b16 %v171
    %v235 = vunpack.c.h.b16 %v171
    %v236 = vpack.c.b16 %v224, %v220
    %v237 = vpack.c.b16 %v225, %v221
    %v238 = vpack.c.b16 %v226, %v222
    %v239 = vpack.c.b16 %v227, %v223
    %v240 = vpack.c.b16 %v232, %v228
    %v241 = vpack.c.b16 %v233, %v229
    %v242 = vpack.c.b16 %v234, %v230
    %v243 = vpack.c.b16 %v235, %v231
    %vm252 = vcmask 261120
    %v254 = vsel %vm252, %v204, 0
    %v257 = vsel %vm252, %v205, 0
    %v260 = vsel %vm252, %v206, 0
    %v263 = vsel %vm252, %v207, 0
    %v266 = vsel %vm252, %v208, 0
    %v269 = vsel %vm252, %v209, 0
    %v272 = vsel %vm252, %v210, 0
    %v275 = vsel %vm252, %v211, 0
    %277 = vmatprep.subr.bf16.mxu0 %v237
    %278 = vmatpush1.bf16.msra.mxu0 %v236
    %279 = vmatprep.subr.bf16.mxu0 %v241
    %280 = vmatpush1.bf16.msra.mxu0 %v240
    %281 = vmatprep.subr.bf16.mxu0 0
    %282 = vmatpush1.bf16.msra.mxu0 0
    %283 = vmatprep.subr.bf16.mxu0 0
    %284 = vmatpush1.bf16.msra.mxu0 0
    %285 = vmatprep.subr.bf16.mxu0 0
    %286 = vmatpush1.bf16.msra.mxu0 0
    %287 = vmatprep.subr.bf16.mxu0 0
    %288 = vmatpush1.bf16.msra.mxu0 0
    %289 = vmatprep.subr.bf16.mxu0 0
    %290 = vmatpush1.bf16.msra.mxu0 0
    %291 = vmatprep.subr.bf16.mxu0 0
    %292 = vmatpush1.bf16.msra.mxu0 0
    %293 = vmatprep.subr.bf16.mxu0 0
    %294 = vmatpush1.bf16.msra.mxu0 0
    %295 = vmatprep.subr.bf16.mxu0 0
    %296 = vmatpush1.bf16.msra.mxu0 0
    %297 = vmatprep.subr.bf16.mxu0 0
    %298 = vmatpush1.bf16.msra.mxu0 0
    %299 = vmatprep.subr.bf16.mxu0 0
    %300 = vmatpush1.bf16.msra.mxu0 0
    %301 = vmatprep.subr.bf16.mxu0 0
    %302 = vmatpush1.bf16.msra.mxu0 0
    %303 = vmatprep.subr.bf16.mxu0 0
    %304 = vmatpush1.bf16.msra.mxu0 0
    %305 = vmatprep.subr.bf16.mxu0 0
    %306 = vmatpush1.bf16.msra.mxu0 0
    %307 = vmatprep.subr.bf16.mxu0 0
    %308 = vmatpush1.bf16.msra.mxu0 0
    %309 = vmatprep.mubr.bf16.mxu0 0
    %310 = vmatmul.mubr.bf16.gmra.mrb[0].mxu0 %v254
    %v311 = vpop.f32.mrb[0].mxu0
    %v312 = vadd.f32 0.0, %v311
    %v313 = vpop.f32.mrb[0].mxu0
    %v314 = vadd.f32 0.0, %v313
    %v315 = vpop.f32.mrb[0].mxu0
    %v316 = vadd.f32 0.0, %v315
    %v317 = vpop.f32.mrb[0].mxu0
    %v318 = vadd.f32 0.0, %v317
    %319 = vmatprep.mubr.bf16.mxu0 0
    %320 = vmatmul.mubr.bf16.gmra.mrb[0].mxu0 %v257
    %v321 = vpop.f32.mrb[0].mxu0
    %v322 = vadd.f32 0.0, %v321
    %v323 = vpop.f32.mrb[0].mxu0
    %v324 = vadd.f32 0.0, %v323
    %v325 = vpop.f32.mrb[0].mxu0
    %v326 = vadd.f32 0.0, %v325
    %v327 = vpop.f32.mrb[0].mxu0
    %v328 = vadd.f32 0.0, %v327
    %329 = vmatprep.mubr.bf16.mxu0 0
    %330 = vmatmul.mubr.bf16.gmra.mrb[0].mxu0 %v260
    %v331 = vpop.f32.mrb[0].mxu0
    %v332 = vadd.f32 0.0, %v331
    %v333 = vpop.f32.mrb[0].mxu0
    %v334 = vadd.f32 0.0, %v333
    %v335 = vpop.f32.mrb[0].mxu0
    %v336 = vadd.f32 0.0, %v335
    %v337 = vpop.f32.mrb[0].mxu0
    %v338 = vadd.f32 0.0, %v337
    %339 = vmatprep.mubr.bf16.mxu0 0
    %340 = vmatmul.mubr.bf16.gmra.mrb[0].mxu0 %v263
    %v341 = vpop.f32.mrb[0].mxu0
    %v342 = vadd.f32 0.0, %v341
    %v343 = vpop.f32.mrb[0].mxu0
    %v344 = vadd.f32 0.0, %v343
    %v345 = vpop.f32.mrb[0].mxu0
    %v346 = vadd.f32 0.0, %v345
    %v347 = vpop.f32.mrb[0].mxu0
    %v348 = vadd.f32 0.0, %v347
    %349 = vmatprep.mubr.bf16.mxu0 0
    %350 = vmatmul.mubr.bf16.gmra.mrb[0].mxu0 %v266
    %v351 = vpop.f32.mrb[0].mxu0
    %v352 = vadd.f32 0.0, %v351
    %v353 = vpop.f32.mrb[0].mxu0
    %v354 = vadd.f32 0.0, %v353
    %v355 = vpop.f32.mrb[0].mxu0
    %v356 = vadd.f32 0.0, %v355
    %v357 = vpop.f32.mrb[0].mxu0
    %v358 = vadd.f32 0.0, %v357
    %359 = vmatprep.mubr.bf16.mxu0 0
    %360 = vmatmul.mubr.bf16.gmra.mrb[0].mxu0 %v269
    %v361 = vpop.f32.mrb[0].mxu0
    %v362 = vadd.f32 0.0, %v361
    %v363 = vpop.f32.mrb[0].mxu0
    %v364 = vadd.f32 0.0, %v363
    %v365 = vpop.f32.mrb[0].mxu0
    %v366 = vadd.f32 0.0, %v365
    %v367 = vpop.f32.mrb[0].mxu0
    %v368 = vadd.f32 0.0, %v367
    %369 = vmatprep.mubr.bf16.mxu0 0
    %370 = vmatmul.mubr.bf16.gmra.mrb[0].mxu0 %v272
    %v371 = vpop.f32.mrb[0].mxu0
    %v372 = vadd.f32 0.0, %v371
    %v373 = vpop.f32.mrb[0].mxu0
    %v374 = vadd.f32 0.0, %v373
    %v375 = vpop.f32.mrb[0].mxu0
    %v376 = vadd.f32 0.0, %v375
    %v377 = vpop.f32.mrb[0].mxu0
    %v378 = vadd.f32 0.0, %v377
    %379 = vmatprep.mubr.bf16.mxu0 0
    %380 = vmatmul.mubr.bf16.gmra.mrb[0].mxu0 %v275
    %v381 = vpop.f32.mrb[0].mxu0
    %v382 = vadd.f32 0.0, %v381
    %v383 = vpop.f32.mrb[0].mxu0
    %v384 = vadd.f32 0.0, %v383
    %v385 = vpop.f32.mrb[0].mxu0
    %v386 = vadd.f32 0.0, %v385
    %v387 = vpop.f32.mrb[0].mxu0
    %v388 = vadd.f32 0.0, %v387
    %389 = vdwg.mxu0
    %390 = vmatprep.subr.bf16.mxu0 %v239
    %391 = vmatpush1.bf16.msra.mxu0 %v238
    %392 = vmatprep.subr.bf16.mxu0 %v243
    %393 = vmatpush1.bf16.msra.mxu0 %v242
    %394 = vmatprep.subr.bf16.mxu0 0
    %395 = vmatpush1.bf16.msra.mxu0 0
    %396 = vmatprep.subr.bf16.mxu0 0
    %397 = vmatpush1.bf16.msra.mxu0 0
    %398 = vmatprep.subr.bf16.mxu0 0
    %399 = vmatpush1.bf16.msra.mxu0 0
    %400 = vmatprep.subr.bf16.mxu0 0
    %401 = vmatpush1.bf16.msra.mxu0 0
    %402 = vmatprep.subr.bf16.mxu0 0
    %403 = vmatpush1.bf16.msra.mxu0 0
    %404 = vmatprep.subr.bf16.mxu0 0
    %405 = vmatpush1.bf16.msra.mxu0 0
    %406 = vmatprep.subr.bf16.mxu0 0
    %407 = vmatpush1.bf16.msra.mxu0 0
    %408 = vmatprep.subr.bf16.mxu0 0
    %409 = vmatpush1.bf16.msra.mxu0 0
    %410 = vmatprep.subr.bf16.mxu0 0
    %411 = vmatpush1.bf16.msra.mxu0 0
    %412 = vmatprep.subr.bf16.mxu0 0
    %413 = vmatpush1.bf16.msra.mxu0 0
    %414 = vmatprep.subr.bf16.mxu0 0
    %415 = vmatpush1.bf16.msra.mxu0 0
    %416 = vmatprep.subr.bf16.mxu0 0
    %417 = vmatpush1.bf16.msra.mxu0 0
    %418 = vmatprep.subr.bf16.mxu0 0
    %419 = vmatpush1.bf16.msra.mxu0 0
    %420 = vmatprep.subr.bf16.mxu0 0
    %421 = vmatpush1.bf16.msra.mxu0 0
    %422 = vmatprep.mubr.bf16.mxu0 0
    %423 = vmatmul.mubr.bf16.gmra.mrb[0].mxu0 %v254
    %v424 = vpop.f32.mrb[0].mxu0
    %v425 = vadd.f32 0.0, %v424
    %v426 = vpop.f32.mrb[0].mxu0
    %v427 = vadd.f32 0.0, %v426
    %v428 = vpop.f32.mrb[0].mxu0
    %v429 = vadd.f32 0.0, %v428
    %v430 = vpop.f32.mrb[0].mxu0
    %v431 = vadd.f32 0.0, %v430
    %432 = vmatprep.mubr.bf16.mxu0 0
    %433 = vmatmul.mubr.bf16.gmra.mrb[0].mxu0 %v257
    %v434 = vpop.f32.mrb[0].mxu0
    %v435 = vadd.f32 0.0, %v434
    %v436 = vpop.f32.mrb[0].mxu0
    %v437 = vadd.f32 0.0, %v436
    %v438 = vpop.f32.mrb[0].mxu0
    %v439 = vadd.f32 0.0, %v438
    %v440 = vpop.f32.mrb[0].mxu0
    %v441 = vadd.f32 0.0, %v440
    %442 = vmatprep.mubr.bf16.mxu0 0
    %443 = vmatmul.mubr.bf16.gmra.mrb[0].mxu0 %v260
    %v444 = vpop.f32.mrb[0].mxu0
    %v445 = vadd.f32 0.0, %v444
    %v446 = vpop.f32.mrb[0].mxu0
    %v447 = vadd.f32 0.0, %v446
    %v448 = vpop.f32.mrb[0].mxu0
    %v449 = vadd.f32 0.0, %v448
    %v450 = vpop.f32.mrb[0].mxu0
    %v451 = vadd.f32 0.0, %v450
    %452 = vmatprep.mubr.bf16.mxu0 0
    %453 = vmatmul.mubr.bf16.gmra.mrb[0].mxu0 %v263
    %v454 = vpop.f32.mrb[0].mxu0
    %v455 = vadd.f32 0.0, %v454
    %v456 = vpop.f32.mrb[0].mxu0
    %v457 = vadd.f32 0.0, %v456
    %v458 = vpop.f32.mrb[0].mxu0
    %v459 = vadd.f32 0.0, %v458
    %v460 = vpop.f32.mrb[0].mxu0
    %v461 = vadd.f32 0.0, %v460
    %462 = vmatprep.mubr.bf16.mxu0 0
    %463 = vmatmul.mubr.bf16.gmra.mrb[0].mxu0 %v266
    %v464 = vpop.f32.mrb[0].mxu0
    %v465 = vadd.f32 0.0, %v464
    %v466 = vpop.f32.mrb[0].mxu0
    %v467 = vadd.f32 0.0, %v466
    %v468 = vpop.f32.mrb[0].mxu0
    %v469 = vadd.f32 0.0, %v468
    %v470 = vpop.f32.mrb[0].mxu0
    %v471 = vadd.f32 0.0, %v470
    %472 = vmatprep.mubr.bf16.mxu0 0
    %473 = vmatmul.mubr.bf16.gmra.mrb[0].mxu0 %v269
    %v474 = vpop.f32.mrb[0].mxu0
    %v475 = vadd.f32 0.0, %v474
    %v476 = vpop.f32.mrb[0].mxu0
    %v477 = vadd.f32 0.0, %v476
    %v478 = vpop.f32.mrb[0].mxu0
    %v479 = vadd.f32 0.0, %v478
    %v480 = vpop.f32.mrb[0].mxu0
    %v481 = vadd.f32 0.0, %v480
    %482 = vmatprep.mubr.bf16.mxu0 0
    %483 = vmatmul.mubr.bf16.gmra.mrb[0].mxu0 %v272
    %v484 = vpop.f32.mrb[0].mxu0
    %v485 = vadd.f32 0.0, %v484
    %v486 = vpop.f32.mrb[0].mxu0
    %v487 = vadd.f32 0.0, %v486
    %v488 = vpop.f32.mrb[0].mxu0
    %v489 = vadd.f32 0.0, %v488
    %v490 = vpop.f32.mrb[0].mxu0
    %v491 = vadd.f32 0.0, %v490
    %492 = vmatprep.mubr.bf16.mxu0 0
    %493 = vmatmul.mubr.bf16.gmra.mrb[0].mxu0 %v275
    %v494 = vpop.f32.mrb[0].mxu0
    %v495 = vadd.f32 0.0, %v494
    %v496 = vpop.f32.mrb[0].mxu0
    %v497 = vadd.f32 0.0, %v496
    %v498 = vpop.f32.mrb[0].mxu0
    %v499 = vadd.f32 0.0, %v498
    %v500 = vpop.f32.mrb[0].mxu0
    %v501 = vadd.f32 0.0, %v500
    %502 = vdwg.mxu0
    %v503 = vadd.f32 %v84, %v312
    %v504 = vadd.f32 %v85, %v314
    %v505 = vadd.f32 %v86, %v425
    %v506 = vadd.f32 %v87, %v427
    %v507 = vadd.f32 %v88, %v316
    %v508 = vadd.f32 %v89, %v318
    %v509 = vadd.f32 %v90, %v429
    %v510 = vadd.f32 %v91, %v431
    %v511 = vadd.f32 %v92, %v322
    %v512 = vadd.f32 %v93, %v324
    %v513 = vadd.f32 %v94, %v435
    %v514 = vadd.f32 %v95, %v437
    %v515 = vadd.f32 %v96, %v326
    %v516 = vadd.f32 %v97, %v328
    %v517 = vadd.f32 %v98, %v439
    %v518 = vadd.f32 %v99, %v441
    %v519 = vadd.f32 %v100, %v332
    %v520 = vadd.f32 %v101, %v334
    %v521 = vadd.f32 %v102, %v445
    %v522 = vadd.f32 %v103, %v447
    %v523 = vadd.f32 %v104, %v336
    %v524 = vadd.f32 %v105, %v338
    %v525 = vadd.f32 %v106, %v449
    %v526 = vadd.f32 %v107, %v451
    %v527 = vadd.f32 %v108, %v342
    %v528 = vadd.f32 %v109, %v344
    %v529 = vadd.f32 %v110, %v455
    %v530 = vadd.f32 %v111, %v457
    %v531 = vadd.f32 %v112, %v346
    %v532 = vadd.f32 %v113, %v348
    %v533 = vadd.f32 %v114, %v459
    %v534 = vadd.f32 %v115, %v461
    %v535 = vadd.f32 %v116, %v352
    %v536 = vadd.f32 %v117, %v354
    %v537 = vadd.f32 %v118, %v465
    %v538 = vadd.f32 %v119, %v467
    %v539 = vadd.f32 %v120, %v356
    %v540 = vadd.f32 %v121, %v358
    %v541 = vadd.f32 %v122, %v469
    %v542 = vadd.f32 %v123, %v471
    %v543 = vadd.f32 %v124, %v362
    %v544 = vadd.f32 %v125, %v364
    %v545 = vadd.f32 %v126, %v475
    %v546 = vadd.f32 %v127, %v477
    %v547 = vadd.f32 %v128, %v366
    %v548 = vadd.f32 %v129, %v368
    %v549 = vadd.f32 %v130, %v479
    %v550 = vadd.f32 %v131, %v481
    %v551 = vadd.f32 %v132, %v372
    %v552 = vadd.f32 %v133, %v374
    %v553 = vadd.f32 %v134, %v485
    %v554 = vadd.f32 %v135, %v487
    %v555 = vadd.f32 %v136, %v376
    %v556 = vadd.f32 %v137, %v378
    %v557 = vadd.f32 %v138, %v489
    %v558 = vadd.f32 %v139, %v491
    %v559 = vadd.f32 %v140, %v382
    %v560 = vadd.f32 %v141, %v384
    %v561 = vadd.f32 %v142, %v495
    %v562 = vadd.f32 %v143, %v497
    %v563 = vadd.f32 %v144, %v386
    %v564 = vadd.f32 %v145, %v388
    %v565 = vadd.f32 %v146, %v499
    %v566 = vadd.f32 %v147, %v501
    %567 = vst [vmem:[#allocation2] sm:$0xff] %v503
    %568 = vst [vmem:[#allocation2 + $0x8] sm:$0xff] %v504
    %569 = vst [vmem:[#allocation2 + $0x10] sm:$0xff] %v505
    %570 = vst [vmem:[#allocation2 + $0x18] sm:$0xff] %v506
    %571 = vst [vmem:[#allocation2 + $0x20] sm:$0xff] %v507
    %572 = vst [vmem:[#allocation2 + $0x28] sm:$0xff] %v508
    %573 = vst [vmem:[#allocation2 + $0x30] sm:$0xff] %v509
    %574 = vst [vmem:[#allocation2 + $0x38] sm:$0xff] %v510
    %575 = vst [vmem:[#allocation2 + $0x40] sm:$0xff] %v511
    %576 = vst [vmem:[#allocation2 + $0x48] sm:$0xff] %v512
    %577 = vst [vmem:[#allocation2 + $0x50] sm:$0xff] %v513
    %578 = vst [vmem:[#allocation2 + $0x58] sm:$0xff] %v514
    %579 = vst [vmem:[#allocation2 + $0x60] sm:$0xff] %v515
    %580 = vst [vmem:[#allocation2 + $0x68] sm:$0xff] %v516
    %581 = vst [vmem:[#allocation2 + $0x70] sm:$0xff] %v517
    %582 = vst [vmem:[#allocation2 + $0x78] sm:$0xff] %v518
    %583 = vst [vmem:[#allocation2 + $0x80] sm:$0xff] %v519
    %584 = vst [vmem:[#allocation2 + $0x88] sm:$0xff] %v520
    %585 = vst [vmem:[#allocation2 + $0x90] sm:$0xff] %v521
    %586 = vst [vmem:[#allocation2 + $0x98] sm:$0xff] %v522
    %587 = vst [vmem:[#allocation2 + $0xa0] sm:$0xff] %v523
    %588 = vst [vmem:[#allocation2 + $0xa8] sm:$0xff] %v524
    %589 = vst [vmem:[#allocation2 + $0xb0] sm:$0xff] %v525
    %590 = vst [vmem:[#allocation2 + $0xb8] sm:$0xff] %v526
    %591 = vst [vmem:[#allocation2 + $0xc0] sm:$0xff] %v527
    %592 = vst [vmem:[#allocation2 + $0xc8] sm:$0xff] %v528
    %593 = vst [vmem:[#allocation2 + $0xd0] sm:$0xff] %v529
    %594 = vst [vmem:[#allocation2 + $0xd8] sm:$0xff] %v530
    %595 = vst [vmem:[#allocation2 + $0xe0] sm:$0xff] %v531
    %596 = vst [vmem:[#allocation2 + $0xe8] sm:$0xff] %v532
    %597 = vst [vmem:[#allocation2 + $0xf0] sm:$0xff] %v533
    %598 = vst [vmem:[#allocation2 + $0xf8] sm:$0xff] %v534
    %599 = vst [vmem:[#allocation2 + $0x100] sm:$0xff] %v535
    %600 = vst [vmem:[#allocation2 + $0x108] sm:$0xff] %v536
    %601 = vst [vmem:[#allocation2 + $0x110] sm:$0xff] %v537
    %602 = vst [vmem:[#allocation2 + $0x118] sm:$0xff] %v538
    %603 = vst [vmem:[#allocation2 + $0x120] sm:$0xff] %v539
    %604 = vst [vmem:[#allocation2 + $0x128] sm:$0xff] %v540
    %605 = vst [vmem:[#allocation2 + $0x130] sm:$0xff] %v541
    %606 = vst [vmem:[#allocation2 + $0x138] sm:$0xff] %v542
    %607 = vst [vmem:[#allocation2 + $0x140] sm:$0xff] %v543
    %608 = vst [vmem:[#allocation2 + $0x148] sm:$0xff] %v544
    %609 = vst [vmem:[#allocation2 + $0x150] sm:$0xff] %v545
    %610 = vst [vmem:[#allocation2 + $0x158] sm:$0xff] %v546
    %611 = vst [vmem:[#allocation2 + $0x160] sm:$0xff] %v547
    %612 = vst [vmem:[#allocation2 + $0x168] sm:$0xff] %v548
    %613 = vst [vmem:[#allocation2 + $0x170] sm:$0xff] %v549
    %614 = vst [vmem:[#allocation2 + $0x178] sm:$0xff] %v550
    %615 = vst [vmem:[#allocation2 + $0x180] sm:$0xff] %v551
    %616 = vst [vmem:[#allocation2 + $0x188] sm:$0xff] %v552
    %617 = vst [vmem:[#allocation2 + $0x190] sm:$0xff] %v553
    %618 = vst [vmem:[#allocation2 + $0x198] sm:$0xff] %v554
    %619 = vst [vmem:[#allocation2 + $0x1a0] sm:$0xff] %v555
    %620 = vst [vmem:[#allocation2 + $0x1a8] sm:$0xff] %v556
    %621 = vst [vmem:[#allocation2 + $0x1b0] sm:$0xff] %v557
    %622 = vst [vmem:[#allocation2 + $0x1b8] sm:$0xff] %v558
    %623 = vst [vmem:[#allocation2 + $0x1c0] sm:$0xff] %v559
    %624 = vst [vmem:[#allocation2 + $0x1c8] sm:$0xff] %v560
    %625 = vst [vmem:[#allocation2 + $0x1d0] sm:$0xff] %v561
    %626 = vst [vmem:[#allocation2 + $0x1d8] sm:$0xff] %v562
    %627 = vst [vmem:[#allocation2 + $0x1e0] sm:$0xff] %v563
    %628 = vst [vmem:[#allocation2 + $0x1e8] sm:$0xff] %v564
    %629 = vst [vmem:[#allocation2 + $0x1f0] sm:$0xff] %v565
    %630 = vst [vmem:[#allocation2 + $0x1f8] sm:$0xff] %v566
    // Predicated region
    $region18: #{tpu_custom_call.1} parent=1 // pred_check
      %p631 = pneg %p16
    $region19: #{tpu_custom_call.1} parent=1 // pred_check_branch
      %633 = sbr.rel (%p631) target = $region21
    $region20: #{tpu_custom_call.1} parent=1 // pred_region
      %v634 = vld [vmem:[#allocation2] sm:$0xff]
      %v635 = vld [vmem:[#allocation2 + $0x8] sm:$0xff]
      %v636 = vld [vmem:[#allocation2 + $0x10] sm:$0xff]
      %v637 = vld [vmem:[#allocation2 + $0x18] sm:$0xff]
      %v638 = vld [vmem:[#allocation2 + $0x20] sm:$0xff]
      %v639 = vld [vmem:[#allocation2 + $0x28] sm:$0xff]
      %v640 = vld [vmem:[#allocation2 + $0x30] sm:$0xff]
      %v641 = vld [vmem:[#allocation2 + $0x38] sm:$0xff]
      %v642 = vld [vmem:[#allocation2 + $0x40] sm:$0xff]
      %v643 = vld [vmem:[#allocation2 + $0x48] sm:$0xff]
      %v644 = vld [vmem:[#allocation2 + $0x50] sm:$0xff]
      %v645 = vld [vmem:[#allocation2 + $0x58] sm:$0xff]
      %v646 = vld [vmem:[#allocation2 + $0x60] sm:$0xff]
      %v647 = vld [vmem:[#allocation2 + $0x68] sm:$0xff]
      %v648 = vld [vmem:[#allocation2 + $0x70] sm:$0xff]
      %v649 = vld [vmem:[#allocation2 + $0x78] sm:$0xff]
      %v650 = vld [vmem:[#allocation2 + $0x80] sm:$0xff]
      %v651 = vld [vmem:[#allocation2 + $0x88] sm:$0xff]
      %v652 = vld [vmem:[#allocation2 + $0x90] sm:$0xff]
      %v653 = vld [vmem:[#allocation2 + $0x98] sm:$0xff]
      %v654 = vld [vmem:[#allocation2 + $0xa0] sm:$0xff]
      %v655 = vld [vmem:[#allocation2 + $0xa8] sm:$0xff]
      %v656 = vld [vmem:[#allocation2 + $0xb0] sm:$0xff]
      %v657 = vld [vmem:[#allocation2 + $0xb8] sm:$0xff]
      %v658 = vld [vmem:[#allocation2 + $0xc0] sm:$0xff]
      %v659 = vld [vmem:[#allocation2 + $0xc8] sm:$0xff]
      %v660 = vld [vmem:[#allocation2 + $0xd0] sm:$0xff]
      %v661 = vld [vmem:[#allocation2 + $0xd8] sm:$0xff]
      %v662 = vld [vmem:[#allocation2 + $0xe0] sm:$0xff]
      %v663 = vld [vmem:[#allocation2 + $0xe8] sm:$0xff]
      %v664 = vld [vmem:[#allocation2 + $0xf0] sm:$0xff]
      %v665 = vld [vmem:[#allocation2 + $0xf8] sm:$0xff]
      %v666 = vld [vmem:[#allocation2 + $0x100] sm:$0xff]
      %v667 = vld [vmem:[#allocation2 + $0x108] sm:$0xff]
      %v668 = vld [vmem:[#allocation2 + $0x110] sm:$0xff]
      %v669 = vld [vmem:[#allocation2 + $0x118] sm:$0xff]
      %v670 = vld [vmem:[#allocation2 + $0x120] sm:$0xff]
      %v671 = vld [vmem:[#allocation2 + $0x128] sm:$0xff]
      %v672 = vld [vmem:[#allocation2 + $0x130] sm:$0xff]
      %v673 = vld [vmem:[#allocation2 + $0x138] sm:$0xff]
      %v674 = vld [vmem:[#allocation2 + $0x140] sm:$0xff]
      %v675 = vld [vmem:[#allocation2 + $0x148] sm:$0xff]
      %v676 = vld [vmem:[#allocation2 + $0x150] sm:$0xff]
      %v677 = vld [vmem:[#allocation2 + $0x158] sm:$0xff]
      %v678 = vld [vmem:[#allocation2 + $0x160] sm:$0xff]
      %v679 = vld [vmem:[#allocation2 + $0x168] sm:$0xff]
      %v680 = vld [vmem:[#allocation2 + $0x170] sm:$0xff]
      %v681 = vld [vmem:[#allocation2 + $0x178] sm:$0xff]
      %v682 = vld [vmem:[#allocation2 + $0x180] sm:$0xff]
      %v683 = vld [vmem:[#allocation2 + $0x188] sm:$0xff]
      %v684 = vld [vmem:[#allocation2 + $0x190] sm:$0xff]
      %v685 = vld [vmem:[#allocation2 + $0x198] sm:$0xff]
      %v686 = vld [vmem:[#allocation2 + $0x1a0] sm:$0xff]
      %v687 = vld [vmem:[#allocation2 + $0x1a8] sm:$0xff]
      %v688 = vld [vmem:[#allocation2 + $0x1b0] sm:$0xff]
      %v689 = vld [vmem:[#allocation2 + $0x1b8] sm:$0xff]
      %v690 = vld [vmem:[#allocation2 + $0x1c0] sm:$0xff]
      %v691 = vld [vmem:[#allocation2 + $0x1c8] sm:$0xff]
      %v692 = vld [vmem:[#allocation2 + $0x1d0] sm:$0xff]
      %v693 = vld [vmem:[#allocation2 + $0x1d8] sm:$0xff]
      %v694 = vld [vmem:[#allocation2 + $0x1e0] sm:$0xff]
      %v695 = vld [vmem:[#allocation2 + $0x1e8] sm:$0xff]
      %v696 = vld [vmem:[#allocation2 + $0x1f0] sm:$0xff]
      %v697 = vld [vmem:[#allocation2 + $0x1f8] sm:$0xff]
      %v698 = vld [vmem:[%s2] sm:$0xf]
      %v700 = vlaneseq
      %v701 = vshrl.u32 %v700, 7
      %v702 = vsub.s32 0, %v701
      %v703 = vrot.slane %v698, %v702
      %v704 = vlaneseq
      %v705 = vshrl.u32 %v704, 7
      %v706 = vsub.s32 1, %v705
      %v707 = vrot.slane %v698, %v706
      %v708 = vlaneseq
      %v709 = vshrl.u32 %v708, 7
      %v710 = vsub.s32 2, %v709
      %v711 = vrot.slane %v698, %v710
      %v712 = vlaneseq
      %v713 = vshrl.u32 %v712, 7
      %v714 = vsub.s32 3, %v713
      %v715 = vrot.slane %v698, %v714
      %v720 = vadd.f32 %v634, %v703
      %v721 = vadd.f32 %v635, %v707
      %v722 = vadd.f32 %v636, %v711
      %v723 = vadd.f32 %v637, %v715
      %v724 = vadd.f32 %v638, %v703
      %v725 = vadd.f32 %v639, %v707
      %v726 = vadd.f32 %v640, %v711
      %v727 = vadd.f32 %v641, %v715
      %v728 = vadd.f32 %v642, %v703
      %v729 = vadd.f32 %v643, %v707
      %v730 = vadd.f32 %v644, %v711
      %v731 = vadd.f32 %v645, %v715
      %v732 = vadd.f32 %v646, %v703
      %v733 = vadd.f32 %v647, %v707
      %v734 = vadd.f32 %v648, %v711
      %v735 = vadd.f32 %v649, %v715
      %v736 = vadd.f32 %v650, %v703
      %v737 = vadd.f32 %v651, %v707
      %v738 = vadd.f32 %v652, %v711
      %v739 = vadd.f32 %v653, %v715
      %v740 = vadd.f32 %v654, %v703
      %v741 = vadd.f32 %v655, %v707
      %v742 = vadd.f32 %v656, %v711
      %v743 = vadd.f32 %v657, %v715
      %v744 = vadd.f32 %v658, %v703
      %v745 = vadd.f32 %v659, %v707
      %v746 = vadd.f32 %v660, %v711
      %v747 = vadd.f32 %v661, %v715
      %v748 = vadd.f32 %v662, %v703
      %v749 = vadd.f32 %v663, %v707
      %v750 = vadd.f32 %v664, %v711
      %v751 = vadd.f32 %v665, %v715
      %v752 = vadd.f32 %v666, %v703
      %v753 = vadd.f32 %v667, %v707
      %v754 = vadd.f32 %v668, %v711
      %v755 = vadd.f32 %v669, %v715
      %v756 = vadd.f32 %v670, %v703
      %v757 = vadd.f32 %v671, %v707
      %v758 = vadd.f32 %v672, %v711
      %v759 = vadd.f32 %v673, %v715
      %v760 = vadd.f32 %v674, %v703
      %v761 = vadd.f32 %v675, %v707
      %v762 = vadd.f32 %v676, %v711
      %v763 = vadd.f32 %v677, %v715
      %v764 = vadd.f32 %v678, %v703
      %v765 = vadd.f32 %v679, %v707
      %v766 = vadd.f32 %v680, %v711
      %v767 = vadd.f32 %v681, %v715
      %v768 = vadd.f32 %v682, %v703
      %v769 = vadd.f32 %v683, %v707
      %v770 = vadd.f32 %v684, %v711
      %v771 = vadd.f32 %v685, %v715
      %v772 = vadd.f32 %v686, %v703
      %v773 = vadd.f32 %v687, %v707
      %v774 = vadd.f32 %v688, %v711
      %v775 = vadd.f32 %v689, %v715
      %v776 = vadd.f32 %v690, %v703
      %v777 = vadd.f32 %v691, %v707
      %v778 = vadd.f32 %v692, %v711
      %v779 = vadd.f32 %v693, %v715
      %v780 = vadd.f32 %v694, %v703
      %v781 = vadd.f32 %v695, %v707
      %v782 = vadd.f32 %v696, %v711
      %v783 = vadd.f32 %v697, %v715
      %v784 = vpack.c.bf16 %v724, %v720
      %v785 = vpack.c.bf16 %v725, %v721
      %v786 = vpack.c.bf16 %v726, %v722
      %v787 = vpack.c.bf16 %v727, %v723
      %v788 = vpack.c.bf16 %v732, %v728
      %v789 = vpack.c.bf16 %v733, %v729
      %v790 = vpack.c.bf16 %v734, %v730
      %v791 = vpack.c.bf16 %v735, %v731
      %v792 = vpack.c.bf16 %v740, %v736
      %v793 = vpack.c.bf16 %v741, %v737
      %v794 = vpack.c.bf16 %v742, %v738
      %v795 = vpack.c.bf16 %v743, %v739
      %v796 = vpack.c.bf16 %v748, %v744
      %v797 = vpack.c.bf16 %v749, %v745
      %v798 = vpack.c.bf16 %v750, %v746
      %v799 = vpack.c.bf16 %v751, %v747
      %v800 = vpack.c.bf16 %v756, %v752
      %v801 = vpack.c.bf16 %v757, %v753
      %v802 = vpack.c.bf16 %v758, %v754
      %v803 = vpack.c.bf16 %v759, %v755
      %v804 = vpack.c.bf16 %v764, %v760
      %v805 = vpack.c.bf16 %v765, %v761
      %v806 = vpack.c.bf16 %v766, %v762
      %v807 = vpack.c.bf16 %v767, %v763
      %v808 = vpack.c.bf16 %v772, %v768
      %v809 = vpack.c.bf16 %v773, %v769
      %v810 = vpack.c.bf16 %v774, %v770
      %v811 = vpack.c.bf16 %v775, %v771
      %v812 = vpack.c.bf16 %v780, %v776
      %v813 = vpack.c.bf16 %v781, %v777
      %v814 = vpack.c.bf16 %v782, %v778
      %v815 = vpack.c.bf16 %v783, %v779
      %v848 = vunpack.c.l.b16 %v784
      %v849 = vunpack.c.l.b16 %v785
      %v850 = vunpack.c.l.b16 %v786
      %v851 = vunpack.c.l.b16 %v787
      %v852 = vunpack.c.h.b16 %v784
      %v853 = vunpack.c.h.b16 %v785
      %v854 = vunpack.c.h.b16 %v786
      %v855 = vunpack.c.h.b16 %v787
      %v856 = vunpack.c.l.b16 %v788
      %v857 = vunpack.c.l.b16 %v789
      %v858 = vunpack.c.l.b16 %v790
      %v859 = vunpack.c.l.b16 %v791
      %v860 = vunpack.c.h.b16 %v788
      %v861 = vunpack.c.h.b16 %v789
      %v862 = vunpack.c.h.b16 %v790
      %v863 = vunpack.c.h.b16 %v791
      %v864 = vunpack.c.l.b16 %v792
      %v865 = vunpack.c.l.b16 %v793
      %v866 = vunpack.c.l.b16 %v794
      %v867 = vunpack.c.l.b16 %v795
      %v868 = vunpack.c.h.b16 %v792
      %v869 = vunpack.c.h.b16 %v793
      %v870 = vunpack.c.h.b16 %v794
      %v871 = vunpack.c.h.b16 %v795
      %v872 = vunpack.c.l.b16 %v796
      %v873 = vunpack.c.l.b16 %v797
      %v874 = vunpack.c.l.b16 %v798
      %v875 = vunpack.c.l.b16 %v799
      %v876 = vunpack.c.h.b16 %v796
      %v877 = vunpack.c.h.b16 %v797
      %v878 = vunpack.c.h.b16 %v798
      %v879 = vunpack.c.h.b16 %v799
      %v880 = vunpack.c.l.b16 %v800
      %v881 = vunpack.c.l.b16 %v801
      %v882 = vunpack.c.l.b16 %v802
      %v883 = vunpack.c.l.b16 %v803
      %v884 = vunpack.c.h.b16 %v800
      %v885 = vunpack.c.h.b16 %v801
      %v886 = vunpack.c.h.b16 %v802
      %v887 = vunpack.c.h.b16 %v803
      %v888 = vunpack.c.l.b16 %v804
      %v889 = vunpack.c.l.b16 %v805
      %v890 = vunpack.c.l.b16 %v806
      %v891 = vunpack.c.l.b16 %v807
      %v892 = vunpack.c.h.b16 %v804
      %v893 = vunpack.c.h.b16 %v805
      %v894 = vunpack.c.h.b16 %v806
      %v895 = vunpack.c.h.b16 %v807
      %v896 = vunpack.c.l.b16 %v808
      %v897 = vunpack.c.l.b16 %v809
      %v898 = vunpack.c.l.b16 %v810
      %v899 = vunpack.c.l.b16 %v811
      %v900 = vunpack.c.h.b16 %v808
      %v901 = vunpack.c.h.b16 %v809
      %v902 = vunpack.c.h.b16 %v810
      %v903 = vunpack.c.h.b16 %v811
      %v904 = vunpack.c.l.b16 %v812
      %v905 = vunpack.c.l.b16 %v813
      %v906 = vunpack.c.l.b16 %v814
      %v907 = vunpack.c.l.b16 %v815
      %v908 = vunpack.c.h.b16 %v812
      %v909 = vunpack.c.h.b16 %v813
      %v910 = vunpack.c.h.b16 %v814
      %v911 = vunpack.c.h.b16 %v815
      %v912 = vpack.c.b16 %v849, %v848
      %v913 = vpack.c.b16 %v851, %v850
      %v914 = vpack.c.b16 %v853, %v852
      %v915 = vpack.c.b16 %v855, %v854
      %v916 = vpack.c.b16 %v857, %v856
      %v917 = vpack.c.b16 %v859, %v858
      %v918 = vpack.c.b16 %v861, %v860
      %v919 = vpack.c.b16 %v863, %v862
      %v920 = vpack.c.b16 %v865, %v864
      %v921 = vpack.c.b16 %v867, %v866
      %v922 = vpack.c.b16 %v869, %v868
      %v923 = vpack.c.b16 %v871, %v870
      %v924 = vpack.c.b16 %v873, %v872
      %v925 = vpack.c.b16 %v875, %v874
      %v926 = vpack.c.b16 %v877, %v876
      %v927 = vpack.c.b16 %v879, %v878
      %v928 = vpack.c.b16 %v881, %v880
      %v929 = vpack.c.b16 %v883, %v882
      %v930 = vpack.c.b16 %v885, %v884
      %v931 = vpack.c.b16 %v887, %v886
      %v932 = vpack.c.b16 %v889, %v888
      %v933 = vpack.c.b16 %v891, %v890
      %v934 = vpack.c.b16 %v893, %v892
      %v935 = vpack.c.b16 %v895, %v894
      %v936 = vpack.c.b16 %v897, %v896
      %v937 = vpack.c.b16 %v899, %v898
      %v938 = vpack.c.b16 %v901, %v900
      %v939 = vpack.c.b16 %v903, %v902
      %v940 = vpack.c.b16 %v905, %v904
      %v941 = vpack.c.b16 %v907, %v906
      %v942 = vpack.c.b16 %v909, %v908
      %v943 = vpack.c.b16 %v911, %v910
      %976 = vst [vmem:[#allocation3] sm:$0xff] %v912
      %977 = vst [vmem:[#allocation3 + $0x8] sm:$0xff] %v913
      %978 = vst [vmem:[#allocation3 + $0x10] sm:$0xff] %v914
      %979 = vst [vmem:[#allocation3 + $0x18] sm:$0xff] %v915
      %980 = vst [vmem:[#allocation3 + $0x20] sm:$0xff] %v916
      %981 = vst [vmem:[#allocation3 + $0x28] sm:$0xff] %v917
      %982 = vst [vmem:[#allocation3 + $0x30] sm:$0xff] %v918
      %983 = vst [vmem:[#allocation3 + $0x38] sm:$0xff] %v919
      %984 = vst [vmem:[#allocation3 + $0x40] sm:$0xff] %v920
      %985 = vst [vmem:[#allocation3 + $0x48] sm:$0xff] %v921
      %986 = vst [vmem:[#allocation3 + $0x50] sm:$0xff] %v922
      %987 = vst [vmem:[#allocation3 + $0x58] sm:$0xff] %v923
      %988 = vst [vmem:[#allocation3 + $0x60] sm:$0xff] %v924
      %989 = vst [vmem:[#allocation3 + $0x68] sm:$0xff] %v925
      %990 = vst [vmem:[#allocation3 + $0x70] sm:$0xff] %v926
      %991 = vst [vmem:[#allocation3 + $0x78] sm:$0xff] %v927
      %992 = vst [vmem:[#allocation3 + $0x80] sm:$0xff] %v928
      %993 = vst [vmem:[#allocation3 + $0x88] sm:$0xff] %v929
      %994 = vst [vmem:[#allocation3 + $0x90] sm:$0xff] %v930
      %995 = vst [vmem:[#allocation3 + $0x98] sm:$0xff] %v931
      %996 = vst [vmem:[#allocation3 + $0xa0] sm:$0xff] %v932
      %997 = vst [vmem:[#allocation3 + $0xa8] sm:$0xff] %v933
      %998 = vst [vmem:[#allocation3 + $0xb0] sm:$0xff] %v934
      %999 = vst [vmem:[#allocation3 + $0xb8] sm:$0xff] %v935
      %1000 = vst [vmem:[#allocation3 + $0xc0] sm:$0xff] %v936
      %1001 = vst [vmem:[#allocation3 + $0xc8] sm:$0xff] %v937
      %1002 = vst [vmem:[#allocation3 + $0xd0] sm:$0xff] %v938
      %1003 = vst [vmem:[#allocation3 + $0xd8] sm:$0xff] %v939
      %1004 = vst [vmem:[#allocation3 + $0xe0] sm:$0xff] %v940
      %1005 = vst [vmem:[#allocation3 + $0xe8] sm:$0xff] %v941
      %1006 = vst [vmem:[#allocation3 + $0xf0] sm:$0xff] %v942
      %1007 = vst [vmem:[#allocation3 + $0xf8] sm:$0xff] %v943
    $region21: #{tpu_custom_call.1} parent=1 // pred_fallthru
      _
    // Predicated region
    $region22: #{tpu_custom_call.1} parent=1 // pred_check
      _
    $region23: #{tpu_custom_call.1} parent=1 // pred_check_branch
      %1009 = sbr.rel (0) target = $region25
    $region24: #{tpu_custom_call.1} parent=1 // pred_region
      %s1011 = ssub.s32 4096, 4096
      %1012 = vsyncadd [#allocation4], %s1011
      %s1013 = sshll.u32 [#allocation3], 4
      %s1014 = int_to_ptr.vmem [resolvable:$true] %s1013
      %1019 = dma.vmem_to_hbm [thread:$0]  %s1014, 4096, %s3, [#allocation4], 256, 256, 16
    $region25: #{tpu_custom_call.1} parent=1 // pred_fallthru
      _
    // Predicated region
    $region26: #{tpu_custom_call.1} parent=1 // pred_check
      _
    $region27: #{tpu_custom_call.1} parent=1 // pred_check_branch
      %1021 = sbr.rel (0) target = $region29
    $region28: #{tpu_custom_call.1} parent=1 // pred_region
      %1022 = dma.done [#allocation4], 4096
    $region29: #{tpu_custom_call.1} parent=1 // pred_fallthru
      _
    %1023 = vsyncpa [#allocation4], 1

</llo_original>
